<compile_context>
chip_gen: v7x
topology: tpu7x:2x2x1
jax: 0.10.0
libtpu: 0.0.40
codegen_flags: <defaults>
</compile_context>

<pallas_src>
import functools

import jax
import jax.numpy as jnp
from jax.experimental import pallas as pl
from jax.experimental.pallas import tpu as pltpu


def _concat_block_kernel(x_ref, a1_ref, g1_ref, b1_ref, w1t_ref, zb_ref,
                         a2_ref, g2_ref, b2_ref, out_ref, *, eps):
    # x tile in the ORIGINAL layout: (C_in, tT) — channels on sublanes,
    # time on lanes.
    x = x_ref[0]

    # ---- pre: PReLU (single shared alpha) + LayerNorm over channels (axis 0)
    a1 = a1_ref[0, 0]
    y = jnp.where(x >= 0.0, x, a1 * x)
    mu = jnp.mean(y, axis=0, keepdims=True)                      # (1, tT)
    var = jnp.mean(jnp.square(y - mu), axis=0, keepdims=True)
    y = (y - mu) * jax.lax.rsqrt(var + eps)
    y = y * g1_ref[...] + b1_ref[...]                            # (C_in, 1) bcast

    # ---- Linear on concat([y, broadcast(s)]):
    #   z^T = W[:C_in]^T @ y  +  (s @ W[C_in:] + bias)^T
    # The aux part + bias is precomputed per batch on the host (zb_ref).
    z = jnp.dot(w1t_ref[...], y, preferred_element_type=jnp.float32)  # (C_out, tT)
    z = z + zb_ref[0]                                            # (C_out, 1) bcast

    # ---- post: PReLU + LayerNorm over output channels (axis 0) ----
    a2 = a2_ref[0, 0]
    z = jnp.where(z >= 0.0, z, a2 * z)
    mu2 = jnp.mean(z, axis=0, keepdims=True)
    var2 = jnp.mean(jnp.square(z - mu2), axis=0, keepdims=True)
    z = (z - mu2) * jax.lax.rsqrt(var2 + eps)
    z = z * g2_ref[...] + b2_ref[...]

    # ---- residual: re-read the ref so the input tile isn't held in vregs
    # across the matmul (spare vld slots instead of spill/fill traffic).
    out_ref[0] = x_ref[0] + z


def _pick_tile_t(T, cap=1024):
    """Largest lane-aligned (multiple-of-128) time tile that divides T, capped
    so a double-buffered (C, tT) f32 block stays small on every TPU gen."""
    if T <= cap:
        return T
    for tt in range(cap, 127, -128):
        if T % tt == 0:
            return tt
    return T  # fallback: single tile


def concat_block(x, s, params, *, eps=1e-8, tile_t=None):
    """x: (B, C_in, T) f32, s: (B, aux_dim) f32 -> (B, C_in, T) f32."""
    B, C_in, T = x.shape
    C_out = params["w"].shape[1]
    assert C_out == C_in, "residual add requires output_dim == input_dim"

    if tile_t is None:
        tile_t = _pick_tile_t(T)
    assert T % tile_t == 0
    n_t = T // tile_t

    # Host-side (tiny, one-shot) parameter reshapes for the (C, T) layout.
    w1t = params["w"][:C_in].T                                  # (C_out, C_in)
    w2 = params["w"][C_in:]                                     # (aux,   C_out)
    # Hoisted aux projection + linear bias -> per-batch column bias.
    zb = (s @ w2 + params["wb"][0])[:, :, None]                 # (B, C_out, 1)
    g1 = params["g1"].reshape(C_in, 1)
    b1 = params["b1"].reshape(C_in, 1)
    g2 = params["g2"].reshape(C_out, 1)
    b2 = params["b2"].reshape(C_out, 1)

    full = lambda shape: pl.BlockSpec(shape, lambda b, t: (0,) * len(shape))

    out = pl.pallas_call(
        functools.partial(_concat_block_kernel, eps=eps),
        out_shape=jax.ShapeDtypeStruct((B, C_out, T), jnp.float32),
        grid_spec=pltpu.PrefetchScalarGridSpec(
            num_scalar_prefetch=0,
            grid=(B, n_t),
            in_specs=[
                pl.BlockSpec((1, C_in, tile_t), lambda b, t: (b, 0, t)),  # x tile
                full((1, 1)),                                   # prelu1 alpha
                full((C_in, 1)),                                # ln1 gamma
                full((C_in, 1)),                                # ln1 beta
                full((C_out, C_in)),                            # W[:C_in]^T
                pl.BlockSpec((1, C_out, 1), lambda b, t: (b, 0, 0)),      # aux bias
                full((1, 1)),                                   # prelu2 alpha
                full((C_out, 1)),                               # ln2 gamma
                full((C_out, 1)),                               # ln2 beta
            ],
            out_specs=pl.BlockSpec((1, C_out, tile_t), lambda b, t: (b, 0, t)),
        ),
        compiler_params=pltpu.CompilerParams(
            dimension_semantics=("parallel", "parallel")),
    )(x, params["a1"], g1, b1, w1t, zb, params["a2"], g2, b2)

    return out


def init_params(key, input_dim, aux_dim, output_dim):
    """Deterministic synthetic parameters matching the PyTorch module's shapes."""
    k_w, k_b, k_g1, k_b1, k_g2, k_b2 = jax.random.split(key, 6)
    fan_in = input_dim + aux_dim
    bound = 1.0 / jnp.sqrt(fan_in)
    return {
        # pre: PReLU (num_parameters=1, default 0.25) + LayerNorm(input_dim)
        "a1": jnp.full((1, 1), 0.25, jnp.float32),
        "g1": (1.0 + 0.1 * jax.random.normal(k_g1, (1, input_dim))).astype(jnp.float32),
        "b1": (0.1 * jax.random.normal(k_b1, (1, input_dim))).astype(jnp.float32),
        # post: Linear(input_dim + aux_dim -> output_dim)
        "w": jax.random.uniform(k_w, (fan_in, output_dim), jnp.float32, -bound, bound),
        "wb": jax.random.uniform(k_b, (1, output_dim), jnp.float32, -bound, bound),
        # post: PReLU + LayerNorm(output_dim)
        "a2": jnp.full((1, 1), 0.25, jnp.float32),
        "g2": (1.0 + 0.1 * jax.random.normal(k_g2, (1, output_dim))).astype(jnp.float32),
        "b2": (0.1 * jax.random.normal(k_b2, (1, output_dim))).astype(jnp.float32),
    }


def concat_block_ref(x, s, params, *, eps=1e-8):
    """Pure-JAX reference mirroring the PyTorch forward (for correctness check)."""
    B, C, T = x.shape
    y = jnp.transpose(x, (0, 2, 1))                                  # (B, T, C)
    a1 = params["a1"][0, 0]
    y = jnp.maximum(y, 0) + a1 * jnp.minimum(y, 0)
    mu = y.mean(-1, keepdims=True)
    var = ((y - mu) ** 2).mean(-1, keepdims=True)
    y = (y - mu) / jnp.sqrt(var + eps) * params["g1"][0] + params["b1"][0]
    s_rep = jnp.broadcast_to(s[:, None, :], (B, T, s.shape[1]))      # repeat over T
    y = jnp.concatenate([y, s_rep], axis=-1)
    y = y @ params["w"] + params["wb"][0]
    a2 = params["a2"][0, 0]
    y = jnp.maximum(y, 0) + a2 * jnp.minimum(y, 0)
    mu = y.mean(-1, keepdims=True)
    var = ((y - mu) ** 2).mean(-1, keepdims=True)
    y = (y - mu) / jnp.sqrt(var + eps) * params["g2"][0] + params["b2"][0]
    return x + jnp.transpose(y, (0, 2, 1))


if __name__ == "__main__":
    # Residual requires C_OUT == C_IN.  T chosen so the kernel exercises the
    # time-tiled grid (grid = (B, T // tile_t) = (2, 2)).
    B, C_IN, AUX, C_OUT, T = 2, 32, 16, 32, 256

    key = jax.random.PRNGKey(0)
    kx, ks, kp = jax.random.split(key, 3)
    x = jax.random.normal(kx, (B, C_IN, T), jnp.float32)
    s = jax.random.normal(ks, (B, AUX), jnp.float32)
    params = init_params(kp, C_IN, AUX, C_OUT)

    out = concat_block(x, s, params, tile_t=128)
    out = jax.block_until_ready(out)

    ref = concat_block_ref(x, s, params)
    assert out.shape == (B, C_IN, T)
    # Tolerance slightly loosened vs exact f32: the kernel splits the concat
    # matmul (K=C_in in-kernel + K=aux hoisted) and computes W^T@y, so the MXU
    # accumulation order differs from the fused reference matmul.
    assert jnp.allclose(out, ref, atol=1e-4, rtol=1e-4), "mismatch vs JAX reference"

    print("KERNEL_OK")
</pallas_src>

<mosaic_0001>
module attributes {stable_mosaic.version = 11 : i64} {
  func.func @_concat_block_kernel(%arg0: i32, %arg1: i32, %arg2: memref<1x32x128xf32, #tpu.memory_space<vmem>>, %arg3: memref<1x1xf32, #tpu.memory_space<vmem>>, %arg4: memref<32x1xf32, #tpu.memory_space<vmem>>, %arg5: memref<32x1xf32, #tpu.memory_space<vmem>>, %arg6: memref<32x32xf32, #tpu.memory_space<vmem>>, %arg7: memref<1x32x1xf32, #tpu.memory_space<vmem>>, %arg8: memref<1x1xf32, #tpu.memory_space<vmem>>, %arg9: memref<32x1xf32, #tpu.memory_space<vmem>>, %arg10: memref<32x1xf32, #tpu.memory_space<vmem>>, %arg11: memref<1x32x128xf32, #tpu.memory_space<vmem>>) attributes {dimension_semantics = [#tpu.dimension_semantics<parallel>, #tpu.dimension_semantics<parallel>], iteration_bounds = array<i64: 2, 2>, scalar_prefetch = 0 : i64, scratch_operands = 0 : i64, tpu.core_type = #tpu.core_type<tc>, window_params = [{transform_indices = @transform_0, window_bounds = array<i64: 1, 32, 128>}, {pipeline_mode = #tpu.pipeline_mode<synchronous>, transform_indices = @transform_1, window_bounds = array<i64: 1, 1>}, {pipeline_mode = #tpu.pipeline_mode<synchronous>, transform_indices = @transform_2, window_bounds = array<i64: 32, 1>}, {pipeline_mode = #tpu.pipeline_mode<synchronous>, transform_indices = @transform_3, window_bounds = array<i64: 32, 1>}, {pipeline_mode = #tpu.pipeline_mode<synchronous>, transform_indices = @transform_4, window_bounds = array<i64: 32, 32>}, {transform_indices = @transform_5, window_bounds = array<i64: 1, 32, 1>}, {pipeline_mode = #tpu.pipeline_mode<synchronous>, transform_indices = @transform_6, window_bounds = array<i64: 1, 1>}, {pipeline_mode = #tpu.pipeline_mode<synchronous>, transform_indices = @transform_7, window_bounds = array<i64: 32, 1>}, {pipeline_mode = #tpu.pipeline_mode<synchronous>, transform_indices = @transform_8, window_bounds = array<i64: 32, 1>}, {transform_indices = @transform_9, window_bounds = array<i64: 1, 32, 128>}]} {
    %c0 = arith.constant 0 : index
    %c0_0 = arith.constant 0 : index
    %c0_1 = arith.constant 0 : index
    %0 = vector.load %arg2[%c0, %c0_0, %c0_1] : memref<1x32x128xf32, #tpu.memory_space<vmem>>, vector<1x32x128xf32>
    %1 = vector.shape_cast %0 : vector<1x32x128xf32> to vector<32x128xf32>
    %c0_2 = arith.constant 0 : index
    %c0_3 = arith.constant 0 : index
    %2 = vector.load %arg3[%c0_2, %c0_3] : memref<1x1xf32, #tpu.memory_space<vmem>>, vector<1x1xf32>
    %3 = vector.extract %2[0, 0] : f32 from vector<1x1xf32>
    %cst = arith.constant 0.000000e+00 : f32
    %4 = vector.broadcast %cst : f32 to vector<32x128xf32>
    %5 = arith.cmpf oge, %1, %4 : vector<32x128xf32>
    %6 = vector.broadcast %3 : f32 to vector<32x128xf32>
    %7 = arith.mulf %6, %1 : vector<32x128xf32>
    %8 = arith.select %5, %1, %7 : vector<32x128xi1>, vector<32x128xf32>
    %cst_4 = arith.constant dense<0.000000e+00> : vector<128xf32>
    %9 = vector.multi_reduction <add>, %8, %cst_4 [0] : vector<32x128xf32> to vector<128xf32>
    %10 = vector.shape_cast %9 : vector<128xf32> to vector<1x128xf32>
    %cst_5 = arith.constant 3.200000e+01 : f32
    %11 = vector.broadcast %cst_5 : f32 to vector<1x128xf32>
    %12 = arith.divf %10, %11 : vector<1x128xf32>
    %13 = vector.broadcast %12 : vector<1x128xf32> to vector<32x128xf32>
    %14 = arith.subf %8, %13 : vector<32x128xf32>
    %15 = arith.mulf %14, %14 : vector<32x128xf32>
    %cst_6 = arith.constant dense<0.000000e+00> : vector<128xf32>
    %16 = vector.multi_reduction <add>, %15, %cst_6 [0] : vector<32x128xf32> to vector<128xf32>
    %17 = vector.shape_cast %16 : vector<128xf32> to vector<1x128xf32>
    %cst_7 = arith.constant 3.200000e+01 : f32
    %18 = vector.broadcast %cst_7 : f32 to vector<1x128xf32>
    %19 = arith.divf %17, %18 : vector<1x128xf32>
    %20 = vector.broadcast %12 : vector<1x128xf32> to vector<32x128xf32>
    %21 = arith.subf %8, %20 : vector<32x128xf32>
    %cst_8 = arith.constant 9.99999993E-9 : f32
    %22 = vector.broadcast %cst_8 : f32 to vector<1x128xf32>
    %23 = arith.addf %19, %22 : vector<1x128xf32>
    %24 = math.rsqrt %23 : vector<1x128xf32>
    %25 = vector.broadcast %24 : vector<1x128xf32> to vector<32x128xf32>
    %26 = arith.mulf %21, %25 : vector<32x128xf32>
    %c0_9 = arith.constant 0 : index
    %c0_10 = arith.constant 0 : index
    %27 = vector.load %arg4[%c0_9, %c0_10] : memref<32x1xf32, #tpu.memory_space<vmem>>, vector<32x1xf32>
    %28 = vector.broadcast %27 : vector<32x1xf32> to vector<32x128xf32>
    %29 = arith.mulf %26, %28 : vector<32x128xf32>
    %c0_11 = arith.constant 0 : index
    %c0_12 = arith.constant 0 : index
    %30 = vector.load %arg5[%c0_11, %c0_12] : memref<32x1xf32, #tpu.memory_space<vmem>>, vector<32x1xf32>
    %31 = vector.broadcast %30 : vector<32x1xf32> to vector<32x128xf32>
    %32 = arith.addf %29, %31 : vector<32x128xf32>
    %c0_13 = arith.constant 0 : index
    %c0_14 = arith.constant 0 : index
    %33 = vector.load %arg6[%c0_13, %c0_14] : memref<32x32xf32, #tpu.memory_space<vmem>>, vector<32x32xf32>
    %cst_15 = arith.constant dense<0.000000e+00> : vector<32x128xf32>
    %34 = tpu.matmul %33, %32, %cst_15 {dimension_numbers = #tpu.dot_dimension_numbers<[1], [0], [0], [1], [0, 0, 1, 1], [], []>} : vector<32x32xf32>, vector<32x128xf32>, vector<32x128xf32> -> vector<32x128xf32>
    %c0_16 = arith.constant 0 : index
    %c0_17 = arith.constant 0 : index
    %c0_18 = arith.constant 0 : index
    %35 = vector.load %arg7[%c0_16, %c0_17, %c0_18] : memref<1x32x1xf32, #tpu.memory_space<vmem>>, vector<1x32x1xf32>
    %36 = vector.shape_cast %35 : vector<1x32x1xf32> to vector<32x1xf32>
    %37 = vector.broadcast %36 : vector<32x1xf32> to vector<32x128xf32>
    %38 = arith.addf %34, %37 : vector<32x128xf32>
    %c0_19 = arith.constant 0 : index
    %c0_20 = arith.constant 0 : index
    %39 = vector.load %arg8[%c0_19, %c0_20] : memref<1x1xf32, #tpu.memory_space<vmem>>, vector<1x1xf32>
    %40 = vector.extract %39[0, 0] : f32 from vector<1x1xf32>
    %cst_21 = arith.constant 0.000000e+00 : f32
    %41 = vector.broadcast %cst_21 : f32 to vector<32x128xf32>
    %42 = arith.cmpf oge, %38, %41 : vector<32x128xf32>
    %43 = vector.broadcast %40 : f32 to vector<32x128xf32>
    %44 = arith.mulf %43, %38 : vector<32x128xf32>
    %45 = arith.select %42, %38, %44 : vector<32x128xi1>, vector<32x128xf32>
    %cst_22 = arith.constant dense<0.000000e+00> : vector<128xf32>
    %46 = vector.multi_reduction <add>, %45, %cst_22 [0] : vector<32x128xf32> to vector<128xf32>
    %47 = vector.shape_cast %46 : vector<128xf32> to vector<1x128xf32>
    %cst_23 = arith.constant 3.200000e+01 : f32
    %48 = vector.broadcast %cst_23 : f32 to vector<1x128xf32>
    %49 = arith.divf %47, %48 : vector<1x128xf32>
    %50 = vector.broadcast %49 : vector<1x128xf32> to vector<32x128xf32>
    %51 = arith.subf %45, %50 : vector<32x128xf32>
    %52 = arith.mulf %51, %51 : vector<32x128xf32>
    %cst_24 = arith.constant dense<0.000000e+00> : vector<128xf32>
    %53 = vector.multi_reduction <add>, %52, %cst_24 [0] : vector<32x128xf32> to vector<128xf32>
    %54 = vector.shape_cast %53 : vector<128xf32> to vector<1x128xf32>
    %cst_25 = arith.constant 3.200000e+01 : f32
    %55 = vector.broadcast %cst_25 : f32 to vector<1x128xf32>
    %56 = arith.divf %54, %55 : vector<1x128xf32>
    %57 = vector.broadcast %49 : vector<1x128xf32> to vector<32x128xf32>
    %58 = arith.subf %45, %57 : vector<32x128xf32>
    %cst_26 = arith.constant 9.99999993E-9 : f32
    %59 = vector.broadcast %cst_26 : f32 to vector<1x128xf32>
    %60 = arith.addf %56, %59 : vector<1x128xf32>
    %61 = math.rsqrt %60 : vector<1x128xf32>
    %62 = vector.broadcast %61 : vector<1x128xf32> to vector<32x128xf32>
    %63 = arith.mulf %58, %62 : vector<32x128xf32>
    %c0_27 = arith.constant 0 : index
    %c0_28 = arith.constant 0 : index
    %64 = vector.load %arg9[%c0_27, %c0_28] : memref<32x1xf32, #tpu.memory_space<vmem>>, vector<32x1xf32>
    %65 = vector.broadcast %64 : vector<32x1xf32> to vector<32x128xf32>
    %66 = arith.mulf %63, %65 : vector<32x128xf32>
    %c0_29 = arith.constant 0 : index
    %c0_30 = arith.constant 0 : index
    %67 = vector.load %arg10[%c0_29, %c0_30] : memref<32x1xf32, #tpu.memory_space<vmem>>, vector<32x1xf32>
    %68 = vector.broadcast %67 : vector<32x1xf32> to vector<32x128xf32>
    %69 = arith.addf %66, %68 : vector<32x128xf32>
    %c0_31 = arith.constant 0 : index
    %c0_32 = arith.constant 0 : index
    %c0_33 = arith.constant 0 : index
    %70 = vector.load %arg2[%c0_31, %c0_32, %c0_33] : memref<1x32x128xf32, #tpu.memory_space<vmem>>, vector<1x32x128xf32>
    %71 = vector.shape_cast %70 : vector<1x32x128xf32> to vector<32x128xf32>
    %72 = arith.addf %71, %69 : vector<32x128xf32>
    %c0_34 = arith.constant 0 : index
    %c0_35 = arith.constant 0 : index
    %c0_36 = arith.constant 0 : index
    %73 = vector.load %arg11[%c0_34, %c0_35, %c0_36] : memref<1x32x128xf32, #tpu.memory_space<vmem>>, vector<1x32x128xf32>
    %74 = vector.shape_cast %73 : vector<1x32x128xf32> to vector<32x128xf32>
    %75 = vector.shape_cast %72 : vector<32x128xf32> to vector<1x32x128xf32>
    tpu.vector_store %arg11[%c0_34, %c0_35, %c0_36], %75 {strides = array<i32>} : memref<1x32x128xf32, #tpu.memory_space<vmem>>, vector<1x32x128xf32>,
    return
  }
  func.func @transform_0(%arg0: i32, %arg1: i32) -> (i32, i32, i32) {
    %c0_i32 = arith.constant 0 : i32
    %c0_i32_0 = arith.constant 0 : i32
    return %arg0, %c0_i32, %arg1 : i32, i32, i32
  }
  func.func @transform_1(%arg0: i32, %arg1: i32) -> (i32, i32) {
    %c0_i32 = arith.constant 0 : i32
    %c0_i32_0 = arith.constant 0 : i32
    %c0_i32_1 = arith.constant 0 : i32
    return %c0_i32, %c0_i32_0 : i32, i32
  }
  func.func @transform_2(%arg0: i32, %arg1: i32) -> (i32, i32) {
    %c0_i32 = arith.constant 0 : i32
    %c0_i32_0 = arith.constant 0 : i32
    %c0_i32_1 = arith.constant 0 : i32
    return %c0_i32, %c0_i32_0 : i32, i32
  }
  func.func @transform_3(%arg0: i32, %arg1: i32) -> (i32, i32) {
    %c0_i32 = arith.constant 0 : i32
    %c0_i32_0 = arith.constant 0 : i32
    %c0_i32_1 = arith.constant 0 : i32
    return %c0_i32, %c0_i32_0 : i32, i32
  }
  func.func @transform_4(%arg0: i32, %arg1: i32) -> (i32, i32) {
    %c0_i32 = arith.constant 0 : i32
    %c0_i32_0 = arith.constant 0 : i32
    %c0_i32_1 = arith.constant 0 : i32
    return %c0_i32, %c0_i32_0 : i32, i32
  }
  func.func @transform_5(%arg0: i32, %arg1: i32) -> (i32, i32, i32) {
    %c0_i32 = arith.constant 0 : i32
    %c0_i32_0 = arith.constant 0 : i32
    %c0_i32_1 = arith.constant 0 : i32
    return %arg0, %c0_i32, %c0_i32_0 : i32, i32, i32
  }
  func.func @transform_6(%arg0: i32, %arg1: i32) -> (i32, i32) {
    %c0_i32 = arith.constant 0 : i32
    %c0_i32_0 = arith.constant 0 : i32
    %c0_i32_1 = arith.constant 0 : i32
    return %c0_i32, %c0_i32_0 : i32, i32
  }
  func.func @transform_7(%arg0: i32, %arg1: i32) -> (i32, i32) {
    %c0_i32 = arith.constant 0 : i32
    %c0_i32_0 = arith.constant 0 : i32
    %c0_i32_1 = arith.constant 0 : i32
    return %c0_i32, %c0_i32_0 : i32, i32
  }
  func.func @transform_8(%arg0: i32, %arg1: i32) -> (i32, i32) {
    %c0_i32 = arith.constant 0 : i32
    %c0_i32_0 = arith.constant 0 : i32
    %c0_i32_1 = arith.constant 0 : i32
    return %c0_i32, %c0_i32_0 : i32, i32
  }
  func.func @transform_9(%arg0: i32, %arg1: i32) -> (i32, i32, i32) {
    %c0_i32 = arith.constant 0 : i32
    %c0_i32_0 = arith.constant 0 : i32
    return %arg0, %c0_i32, %arg1 : i32, i32, i32
  }
}

</mosaic_0001>

<llo_original>
// kernel: tpu_custom_call.1
$region0: #{tpu_custom_call.1}
  #allocation0 [shape = 'u32[]', space=smem, size = 0x4, offset = 0x4, fixed_abs, tag = 'smem constant byte address 0x4 - core index']
  #allocation1 [shape = 'u32[144,128]{1,0:T(1,128)}', space=vmem, size = 0x12000, scoped, tag = 'internal scratch']
  #allocation2 [shape = 'f32[1,1]{1,0:T(1,128)S(1)}', space=vmem, size = 0x200, scoped, tag = 'scoped memory for tpu_custom_call.1']
  #allocation3 [shape = 'f32[1,1]{1,0:T(1,128)S(1)}', space=vmem, size = 0x200, scoped, tag = 'scoped memory for tpu_custom_call.1']
  %s0 = inlined_call_operand.vmem [shape: f32[2,32,256], index: 0, kind: input, shape index: {}]
  %s1 = inlined_call_operand.<no memory space> [shape: f32[1,1], index: 1, kind: input, shape index: {}]
  %s2 = inlined_call_operand.vmem [shape: f32[32,1], index: 2, kind: input, shape index: {}]
  %s3 = inlined_call_operand.vmem [shape: f32[32,1], index: 3, kind: input, shape index: {}]
  %s4 = inlined_call_operand.vmem [shape: f32[32,32], index: 4, kind: input, shape index: {}]
  %s5 = inlined_call_operand.vmem [shape: f32[2,32,1], index: 5, kind: input, shape index: {}]
  %s6 = inlined_call_operand.<no memory space> [shape: f32[1,1], index: 6, kind: input, shape index: {}]
  %s7 = inlined_call_operand.vmem [shape: f32[32,1], index: 7, kind: input, shape index: {}]
  %s8 = inlined_call_operand.vmem [shape: f32[32,1], index: 8, kind: input, shape index: {}]
  %s9 = inlined_call_operand.hbm [shape: f32[2,32,256], index: 9, kind: output, shape index: {}]
  %s10 = sld [smem:[#allocation0]]
  $region107: #{tpu_custom_call.1} parent=0
    _
  %s12 = ssub.s32 1, %s10
  %s13 = scalar_select 0, %s12, %s10
  %v14 = vstv %s1
  %15 = vst [vmem:[#allocation2] sm:$0x1] %v14
  %v16 = vstv %s6
  %17 = vst [vmem:[#allocation3] sm:$0x1] %v16
  $region1: #{tpu_custom_call.1} parent=0
    #allocation4 [shape = 'u8[32768]{0}', space=vmem, size = 0x8000, scoped, tag = 'input window, operand 0']
    #allocation5 [shape = 'u8[32768]{0}', space=vmem, size = 0x8000, scoped, tag = 'output window, operand 0']
    #allocation6 [shape = 's32[2]{0}', space=sflag, size = 0x8, scoped, tag = 'scoped memory for tpu_custom_call.1']
    %18 = vsyncpa [#allocation6], 0
    %s19 = scalar_lea.sflag [#allocation6], 1
    %20 = vsyncpa %s19, 0
    loop: start=0, step=1, limit=6
    $region2: #{tpu_custom_call.1} parent=1 // loop_pre_header
      _
    $region3: #{tpu_custom_call.1} parent=1 // loop_header
      %s22 = sphi 0, %s26
      %p23 = scmp.ge.s32.totalorder %s22, 6
      %s29 = sphi 0, %s41
      %s30 = sphi 0, %s37
      %s31 = sphi 0, %s29
      %s32 = sphi 0, %s30
      %s33 = sphi 0, %s31
      %s34 = sphi 0, %s32
      %s46 = sphi 0, %s48
      %s49 = sphi 0, %s46
      %s50 = sphi 0, %s49
      %s66 = sphi 0, %s50
      %s70 = sphi 0, %s70
      %s72 = sphi 0, %s70
      %s73 = sphi 0, %s72
      %s87 = sphi 0, %s73
      %s91 = sphi 0, %s91
      %s93 = sphi 0, %s91
      %s94 = sphi 0, %s93
      %s108 = sphi 0, %s94
      %s112 = sphi 0, %s112
      %s114 = sphi 0, %s112
      %s115 = sphi 0, %s114
      %s129 = sphi 0, %s115
      %s133 = sphi 0, %s133
      %s135 = sphi 0, %s133
      %s136 = sphi 0, %s135
      %s150 = sphi 0, %s136
      %s156 = sphi 0, %s158
      %s159 = sphi 0, %s156
      %s160 = sphi 0, %s159
      %s176 = sphi 0, %s160
      %s180 = sphi 0, %s180
      %s182 = sphi 0, %s180
      %s183 = sphi 0, %s182
      %s197 = sphi 0, %s183
      %s201 = sphi 0, %s201
      %s203 = sphi 0, %s201
      %s204 = sphi 0, %s203
      %s218 = sphi 0, %s204
      %s222 = sphi 0, %s222
      %s224 = sphi 0, %s222
      %s225 = sphi 0, %s224
      %s239 = sphi 0, %s225
      %s247 = sphi 0, %s249
      %s250 = sphi 0, %s247
      %s251 = sphi 0, %s250
      %s267 = sphi 0, %s251
    $region4: #{tpu_custom_call.1} parent=1 // loop_header_branch
      %25 = sbr.rel (%p23) target = $region8
    $region5: #{tpu_custom_call.1} parent=1 // loop_body
      %s27 = ssub.s32 %s22, 1
      %s28 = ssub.s32 %s22, 2
      %s35 = sadd.s32 1, %s30
      %p36 = scmp.ge.s32.totalorder %s35, 2
      %s37 = scalar_select %p36, 0, %s35
      %s38 = sadd.s32 1, %s29
      %s39 = scalar_select %p36, %s38, %s29
      %p40 = scmp.ge.s32.totalorder %s39, 2
      %s41 = scalar_select %p40, 0, %s39
      %s42 = ssub.s32 %s29, %s41
      %s43 = ssub.s32 %s30, %s37
      %s44 = sor.u32 %s42, %s43
      %p45 = scmp.eq.s32.totalorder %s44, 0
      %s47 = sadd.s32 %s46, 1
      %s48 = scalar_select %p45, %s46, %s47
      %p51 = pneg %p45
      %p52 = scmp.eq.s32.totalorder %s22, 3
      %p53 = por %p51, %p52
      %p54 = scmp.ne.s32.totalorder %s46, %s49
      %p55 = scmp.eq.s32.totalorder %s22, 0
      %p56 = por %p54, %p55
      %p57 = scmp.ne.s32.totalorder %s46, %s49
      %p58 = scmp.eq.s32.totalorder %s27, 3
      %p59 = por %p57, %p58
      %p60 = scmp.ne.s32.totalorder %s49, %s50
      %p61 = scmp.eq.s32.totalorder %s27, 0
      %p62 = por %p60, %p61
      %p63 = scmp.ne.s32.totalorder %s49, %s50
      %p64 = scmp.eq.s32.totalorder %s28, 3
      %p65 = por %p63, %p64
      %p67 = scmp.ne.s32.totalorder %s50, %s66
      %p68 = scmp.eq.s32.totalorder %s28, 0
      %p69 = por %p67, %p68
      %s71 = sadd.s32 %s70, 1
      %p74 = scmp.eq.s32.totalorder %s22, 3
      %p75 = scmp.ne.s32.totalorder %s70, %s72
      %p76 = scmp.eq.s32.totalorder %s22, 0
      %p77 = por %p75, %p76
      %p78 = scmp.ne.s32.totalorder %s70, %s72
      %p79 = scmp.eq.s32.totalorder %s27, 3
      %p80 = por %p78, %p79
      %p81 = scmp.ne.s32.totalorder %s72, %s73
      %p82 = scmp.eq.s32.totalorder %s27, 0
      %p83 = por %p81, %p82
      %p84 = scmp.ne.s32.totalorder %s72, %s73
      %p85 = scmp.eq.s32.totalorder %s28, 3
      %p86 = por %p84, %p85
      %p88 = scmp.ne.s32.totalorder %s73, %s87
      %p89 = scmp.eq.s32.totalorder %s28, 0
      %p90 = por %p88, %p89
      %s92 = sadd.s32 %s91, 1
      %p95 = scmp.eq.s32.totalorder %s22, 3
      %p96 = scmp.ne.s32.totalorder %s91, %s93
      %p97 = scmp.eq.s32.totalorder %s22, 0
      %p98 = por %p96, %p97
      %p99 = scmp.ne.s32.totalorder %s91, %s93
      %p100 = scmp.eq.s32.totalorder %s27, 3
      %p101 = por %p99, %p100
      %p102 = scmp.ne.s32.totalorder %s93, %s94
      %p103 = scmp.eq.s32.totalorder %s27, 0
      %p104 = por %p102, %p103
      %p105 = scmp.ne.s32.totalorder %s93, %s94
      %p106 = scmp.eq.s32.totalorder %s28, 3
      %p107 = por %p105, %p106
      %p109 = scmp.ne.s32.totalorder %s94, %s108
      %p110 = scmp.eq.s32.totalorder %s28, 0
      %p111 = por %p109, %p110
      %s113 = sadd.s32 %s112, 1
      %p116 = scmp.eq.s32.totalorder %s22, 3
      %p117 = scmp.ne.s32.totalorder %s112, %s114
      %p118 = scmp.eq.s32.totalorder %s22, 0
      %p119 = por %p117, %p118
      %p120 = scmp.ne.s32.totalorder %s112, %s114
      %p121 = scmp.eq.s32.totalorder %s27, 3
      %p122 = por %p120, %p121
      %p123 = scmp.ne.s32.totalorder %s114, %s115
      %p124 = scmp.eq.s32.totalorder %s27, 0
      %p125 = por %p123, %p124
      %p126 = scmp.ne.s32.totalorder %s114, %s115
      %p127 = scmp.eq.s32.totalorder %s28, 3
      %p128 = por %p126, %p127
      %p130 = scmp.ne.s32.totalorder %s115, %s129
      %p131 = scmp.eq.s32.totalorder %s28, 0
      %p132 = por %p130, %p131
      %s134 = sadd.s32 %s133, 1
      %p137 = scmp.eq.s32.totalorder %s22, 3
      %p138 = scmp.ne.s32.totalorder %s133, %s135
      %p139 = scmp.eq.s32.totalorder %s22, 0
      %p140 = por %p138, %p139
      %p141 = scmp.ne.s32.totalorder %s133, %s135
      %p142 = scmp.eq.s32.totalorder %s27, 3
      %p143 = por %p141, %p142
      %p144 = scmp.ne.s32.totalorder %s135, %s136
      %p145 = scmp.eq.s32.totalorder %s27, 0
      %p146 = por %p144, %p145
      %p147 = scmp.ne.s32.totalorder %s135, %s136
      %p148 = scmp.eq.s32.totalorder %s28, 3
      %p149 = por %p147, %p148
      %p151 = scmp.ne.s32.totalorder %s136, %s150
      %p152 = scmp.eq.s32.totalorder %s28, 0
      %p153 = por %p151, %p152
      %s154 = ssub.s32 %s29, %s41
      %p155 = scmp.eq.s32.totalorder %s154, 0
      %s157 = sadd.s32 %s156, 1
      %s158 = scalar_select %p155, %s156, %s157
      %p161 = pneg %p155
      %p162 = scmp.eq.s32.totalorder %s22, 3
      %p163 = por %p161, %p162
      %p164 = scmp.ne.s32.totalorder %s156, %s159
      %p165 = scmp.eq.s32.totalorder %s22, 0
      %p166 = por %p164, %p165
      %p167 = scmp.ne.s32.totalorder %s156, %s159
      %p168 = scmp.eq.s32.totalorder %s27, 3
      %p169 = por %p167, %p168
      %p170 = scmp.ne.s32.totalorder %s159, %s160
      %p171 = scmp.eq.s32.totalorder %s27, 0
      %p172 = por %p170, %p171
      %p173 = scmp.ne.s32.totalorder %s159, %s160
      %p174 = scmp.eq.s32.totalorder %s28, 3
      %p175 = por %p173, %p174
      %p177 = scmp.ne.s32.totalorder %s160, %s176
      %p178 = scmp.eq.s32.totalorder %s28, 0
      %p179 = por %p177, %p178
      %s181 = sadd.s32 %s180, 1
      %p184 = scmp.eq.s32.totalorder %s22, 3
      %p185 = scmp.ne.s32.totalorder %s180, %s182
      %p186 = scmp.eq.s32.totalorder %s22, 0
      %p187 = por %p185, %p186
      %p188 = scmp.ne.s32.totalorder %s180, %s182
      %p189 = scmp.eq.s32.totalorder %s27, 3
      %p190 = por %p188, %p189
      %p191 = scmp.ne.s32.totalorder %s182, %s183
      %p192 = scmp.eq.s32.totalorder %s27, 0
      %p193 = por %p191, %p192
      %p194 = scmp.ne.s32.totalorder %s182, %s183
      %p195 = scmp.eq.s32.totalorder %s28, 3
      %p196 = por %p194, %p195
      %p198 = scmp.ne.s32.totalorder %s183, %s197
      %p199 = scmp.eq.s32.totalorder %s28, 0
      %p200 = por %p198, %p199
      %s202 = sadd.s32 %s201, 1
      %p205 = scmp.eq.s32.totalorder %s22, 3
      %p206 = scmp.ne.s32.totalorder %s201, %s203
      %p207 = scmp.eq.s32.totalorder %s22, 0
      %p208 = por %p206, %p207
      %p209 = scmp.ne.s32.totalorder %s201, %s203
      %p210 = scmp.eq.s32.totalorder %s27, 3
      %p211 = por %p209, %p210
      %p212 = scmp.ne.s32.totalorder %s203, %s204
      %p213 = scmp.eq.s32.totalorder %s27, 0
      %p214 = por %p212, %p213
      %p215 = scmp.ne.s32.totalorder %s203, %s204
      %p216 = scmp.eq.s32.totalorder %s28, 3
      %p217 = por %p215, %p216
      %p219 = scmp.ne.s32.totalorder %s204, %s218
      %p220 = scmp.eq.s32.totalorder %s28, 0
      %p221 = por %p219, %p220
      %s223 = sadd.s32 %s222, 1
      %p226 = scmp.eq.s32.totalorder %s22, 3
      %p227 = scmp.ne.s32.totalorder %s222, %s224
      %p228 = scmp.eq.s32.totalorder %s22, 0
      %p229 = por %p227, %p228
      %p230 = scmp.ne.s32.totalorder %s222, %s224
      %p231 = scmp.eq.s32.totalorder %s27, 3
      %p232 = por %p230, %p231
      %p233 = scmp.ne.s32.totalorder %s224, %s225
      %p234 = scmp.eq.s32.totalorder %s27, 0
      %p235 = por %p233, %p234
      %p236 = scmp.ne.s32.totalorder %s224, %s225
      %p237 = scmp.eq.s32.totalorder %s28, 3
      %p238 = por %p236, %p237
      %p240 = scmp.ne.s32.totalorder %s225, %s239
      %p241 = scmp.eq.s32.totalorder %s28, 0
      %p242 = por %p240, %p241
      %s243 = ssub.s32 %s29, %s41
      %s244 = ssub.s32 %s30, %s37
      %s245 = sor.u32 %s243, %s244
      %p246 = scmp.eq.s32.totalorder %s245, 0
      %s248 = sadd.s32 %s247, 1
      %s249 = scalar_select %p246, %s247, %s248
      %p252 = pneg %p246
      %p253 = scmp.eq.s32.totalorder %s22, 3
      %p254 = por %p252, %p253
      %p255 = scmp.ne.s32.totalorder %s247, %s250
      %p256 = scmp.eq.s32.totalorder %s22, 0
      %p257 = por %p255, %p256
      %p258 = scmp.ne.s32.totalorder %s247, %s250
      %p259 = scmp.eq.s32.totalorder %s27, 3
      %p260 = por %p258, %p259
      %p261 = scmp.ne.s32.totalorder %s250, %s251
      %p262 = scmp.eq.s32.totalorder %s27, 0
      %p263 = por %p261, %p262
      %p264 = scmp.ne.s32.totalorder %s250, %s251
      %p265 = scmp.eq.s32.totalorder %s28, 3
      %p266 = por %p264, %p265
      %p268 = scmp.ne.s32.totalorder %s251, %s267
      %p269 = scmp.eq.s32.totalorder %s28, 0
      %p270 = por %p268, %p269
      %p271 = scmp.le.s32.totalorder 1, %s22
      %p272 = scmp.lt.s32.totalorder %s22, 5
      %p273 = pnand %p271, %p272
      %p274 = pneg %p273
      // Predicated region
      $region9: #{tpu_custom_call.1} parent=5 // pred_check
        _
      $region10: #{tpu_custom_call.1} parent=5 // pred_check_branch
        %276 = sbr.rel (%p273) target = $region12
      $region11: #{tpu_custom_call.1} parent=5 // pred_region
        %s277 = ssub.s32 %s22, 1
        // Predicated region
        $region13: #{tpu_custom_call.1} parent=11 // pred_check
          %p278 = pneg %p83
        $region14: #{tpu_custom_call.1} parent=11 // pred_check_branch
          %280 = sbr.rel (%p278) target = $region16
        $region15: #{tpu_custom_call.1} parent=11 // pred_region
          _
        $region16: #{tpu_custom_call.1} parent=11 // pred_fallthru
          _
        // Predicated region
        $region17: #{tpu_custom_call.1} parent=11 // pred_check
          %p281 = pneg %p104
        $region18: #{tpu_custom_call.1} parent=11 // pred_check_branch
          %283 = sbr.rel (%p281) target = $region20
        $region19: #{tpu_custom_call.1} parent=11 // pred_region
          _
        $region20: #{tpu_custom_call.1} parent=11 // pred_fallthru
          _
        // Predicated region
        $region21: #{tpu_custom_call.1} parent=11 // pred_check
          %p284 = pneg %p125
        $region22: #{tpu_custom_call.1} parent=11 // pred_check_branch
          %286 = sbr.rel (%p284) target = $region24
        $region23: #{tpu_custom_call.1} parent=11 // pred_region
          _
        $region24: #{tpu_custom_call.1} parent=11 // pred_fallthru
          _
        // Predicated region
        $region25: #{tpu_custom_call.1} parent=11 // pred_check
          %p287 = pneg %p146
        $region26: #{tpu_custom_call.1} parent=11 // pred_check_branch
          %289 = sbr.rel (%p287) target = $region28
        $region27: #{tpu_custom_call.1} parent=11 // pred_region
          _
        $region28: #{tpu_custom_call.1} parent=11 // pred_fallthru
          _
        // Predicated region
        $region29: #{tpu_custom_call.1} parent=11 // pred_check
          %p290 = pneg %p193
        $region30: #{tpu_custom_call.1} parent=11 // pred_check_branch
          %292 = sbr.rel (%p290) target = $region32
        $region31: #{tpu_custom_call.1} parent=11 // pred_region
          _
        $region32: #{tpu_custom_call.1} parent=11 // pred_fallthru
          _
        // Predicated region
        $region33: #{tpu_custom_call.1} parent=11 // pred_check
          %p293 = pneg %p214
        $region34: #{tpu_custom_call.1} parent=11 // pred_check_branch
          %295 = sbr.rel (%p293) target = $region36
        $region35: #{tpu_custom_call.1} parent=11 // pred_region
          _
        $region36: #{tpu_custom_call.1} parent=11 // pred_fallthru
          _
        // Predicated region
        $region37: #{tpu_custom_call.1} parent=11 // pred_check
          %p296 = pneg %p235
        $region38: #{tpu_custom_call.1} parent=11 // pred_check_branch
          %298 = sbr.rel (%p296) target = $region40
        $region39: #{tpu_custom_call.1} parent=11 // pred_region
          _
        $region40: #{tpu_custom_call.1} parent=11 // pred_fallthru
          _
      $region12: #{tpu_custom_call.1} parent=5 // pred_fallthru
        _
      %p299 = scmp.lt.s32.totalorder %s22, 4
      // Predicated region
      $region41: #{tpu_custom_call.1} parent=5 // pred_check
        %p300 = pneg %p299
      $region42: #{tpu_custom_call.1} parent=5 // pred_check_branch
        %302 = sbr.rel (%p300) target = $region44
      $region43: #{tpu_custom_call.1} parent=5 // pred_region
        // Predicated region
        $region45: #{tpu_custom_call.1} parent=43 // pred_check
          %p303 = pneg %p56
        $region46: #{tpu_custom_call.1} parent=43 // pred_check_branch
          %305 = sbr.rel (%p303) target = $region48
        $region47: #{tpu_custom_call.1} parent=43 // pred_region
          %s306 = sand.u32 %s46, 1
          %s307 = sand.u32 %s46, 1
          %s308 = smul.addr %s307, 32
          %s309 = scalar_lea.vmem [#allocation4], %s308
          %s310 = smul.addr %s29, 8
          %s311 = sadd.s32 %s30, %s310
          %s312 = smul.addr %s311, 8
          %s313 = scalar_lea.vmem %s0, %s312
          // Predicated region
          $region49: #{tpu_custom_call.1} parent=47 // pred_check
            _
          $region50: #{tpu_custom_call.1} parent=47 // pred_check_branch
            %315 = sbr.rel (0) target = $region52
          $region51: #{tpu_custom_call.1} parent=47 // pred_region
            // Predicated region
            $region53: #{tpu_custom_call.1} parent=51 // pred_check
              _
            $region54: #{tpu_custom_call.1} parent=51 // pred_check_branch
              %317 = sbr.rel (0) target = $region56
            $region55: #{tpu_custom_call.1} parent=51 // pred_region
              // Predicated region
              $region68: #{tpu_custom_call.1} parent=55 // pred_check
                _
              $region69: #{tpu_custom_call.1} parent=55 // pred_check_branch
                %338 = sbr.rel (0) target = $region71
              $region70: #{tpu_custom_call.1} parent=55 // pred_region
                loop: start=0, step=1, limit=1
                $region72: #{tpu_custom_call.1} parent=70 // loop_pre_header
                  _
                $region73: #{tpu_custom_call.1} parent=70 // loop_header
                  %s340 = sphi 0, %s344
                  %p341 = scmp.ge.s32.totalorder %s340, 1
                  %s345 = sphi %s313, %s313
                  %s346 = sphi %s309, %s309
                $region74: #{tpu_custom_call.1} parent=70 // loop_header_branch
                  %343 = sbr.rel (%p341) target = $region78
                $region75: #{tpu_custom_call.1} parent=70 // loop_body
                  %v347 = vld [vmem:[%s345] sm:$0xff]
                  %348 = vst [vmem:[%s346] sm:$0xff] %v347
                  %v349 = vld [vmem:[%s345 + $0x10] sm:$0xff]
                  %350 = vst [vmem:[%s346 + $0x8] sm:$0xff] %v349
                  %v351 = vld [vmem:[%s345 + $0x20] sm:$0xff]
                  %352 = vst [vmem:[%s346 + $0x10] sm:$0xff] %v351
                  %v353 = vld [vmem:[%s345 + $0x30] sm:$0xff]
                  %354 = vst [vmem:[%s346 + $0x18] sm:$0xff] %v353
                $region76: #{tpu_custom_call.1} parent=70 // loop_footer
                  %s344 = sadd.s32 1, %s340
                $region77: #{tpu_custom_call.1} parent=70 // loop_footer_branch
                  %339 = sbr.rel target = $region73
                $region78: #{tpu_custom_call.1} parent=70 // loop_exit
                  _
              $region71: #{tpu_custom_call.1} parent=55 // pred_fallthru
                _
              // Predicated region
              $region79: #{tpu_custom_call.1} parent=55 // pred_check
                _
              $region80: #{tpu_custom_call.1} parent=55 // pred_check_branch
                %356 = sbr.rel target = $region82
              $region81: #{tpu_custom_call.1} parent=55 // pred_region
                _
              $region82: #{tpu_custom_call.1} parent=55 // pred_fallthru
                _
            $region56: #{tpu_custom_call.1} parent=51 // pred_fallthru
              _
            // Predicated region
            $region57: #{tpu_custom_call.1} parent=51 // pred_check
              _
            $region58: #{tpu_custom_call.1} parent=51 // pred_check_branch
              %319 = sbr.rel target = $region60
            $region59: #{tpu_custom_call.1} parent=51 // pred_region
              loop: start=0, step=1, limit=1
              $region61: #{tpu_custom_call.1} parent=59 // loop_pre_header
                _
              $region62: #{tpu_custom_call.1} parent=59 // loop_header
                %s322 = sphi 0, %s326
                %p323 = scmp.ge.s32.totalorder %s322, 1
                %s327 = sphi %s313, %s313
                %s328 = sphi %s309, %s309
              $region63: #{tpu_custom_call.1} parent=59 // loop_header_branch
                %325 = sbr.rel (%p323) target = $region67
              $region64: #{tpu_custom_call.1} parent=59 // loop_body
                %v329 = vld [vmem:[%s327] sm:$0xff]
                %330 = vst [vmem:[%s328] sm:$0xff] %v329
                %v331 = vld [vmem:[%s327 + $0x10] sm:$0xff]
                %332 = vst [vmem:[%s328 + $0x8] sm:$0xff] %v331
                %v333 = vld [vmem:[%s327 + $0x20] sm:$0xff]
                %334 = vst [vmem:[%s328 + $0x10] sm:$0xff] %v333
                %v335 = vld [vmem:[%s327 + $0x30] sm:$0xff]
                %336 = vst [vmem:[%s328 + $0x18] sm:$0xff] %v335
              $region65: #{tpu_custom_call.1} parent=59 // loop_footer
                %s326 = sadd.s32 1, %s322
              $region66: #{tpu_custom_call.1} parent=59 // loop_footer_branch
                %321 = sbr.rel target = $region62
              $region67: #{tpu_custom_call.1} parent=59 // loop_exit
                _
            $region60: #{tpu_custom_call.1} parent=51 // pred_fallthru
              _
          $region52: #{tpu_custom_call.1} parent=47 // pred_fallthru
            _
          %357 = vnop
        $region48: #{tpu_custom_call.1} parent=43 // pred_fallthru
          _
        // Predicated region
        $region83: #{tpu_custom_call.1} parent=43 // pred_check
          %p358 = pneg %p166
        $region84: #{tpu_custom_call.1} parent=43 // pred_check_branch
          %360 = sbr.rel (%p358) target = $region86
        $region85: #{tpu_custom_call.1} parent=43 // pred_region
          %p361 = scmp.lt.s32.totalorder %s29, 1
          %s362 = scalar_select %p361, %s29, 1
          %s363 = smul.addr %s362, 4
          %s364 = smul.addr %s363, 8
          %s365 = scalar_lea.vmem %s5, %s364
        $region86: #{tpu_custom_call.1} parent=43 // pred_fallthru
          _
      $region44: #{tpu_custom_call.1} parent=5 // pred_fallthru
        _
      %p366 = scmp.le.s32.totalorder 1, %s22
      %p367 = scmp.lt.s32.totalorder %s22, 5
      %p368 = pnand %p366, %p367
      %p369 = pneg %p368
      // Predicated region
      $region87: #{tpu_custom_call.1} parent=5 // pred_check
        _
      $region88: #{tpu_custom_call.1} parent=5 // pred_check_branch
        %371 = sbr.rel (%p368) target = $region90
      $region89: #{tpu_custom_call.1} parent=5 // pred_region
        %s372 = ssub.s32 %s22, 1
        %s373 = sand.u32 %s49, 1
        %s374 = sand.u32 %s49, 1
        %s375 = smul.addr %s374, 32
        %s376 = scalar_lea.vmem [#allocation4], %s375
        // Predicated region
        $region91: #{tpu_custom_call.1} parent=89 // pred_check
          %p377 = pneg %p62
        $region92: #{tpu_custom_call.1} parent=89 // pred_check_branch
          %379 = sbr.rel (%p377) target = $region94
        $region93: #{tpu_custom_call.1} parent=89 // pred_region
          _
        $region94: #{tpu_custom_call.1} parent=89 // pred_fallthru
          _
        %s380 = sand.u32 %s49, 1
        %s381 = sand.u32 %s49, 1
        %s382 = smul.addr %s381, 32
        %s383 = scalar_lea.vmem [#allocation4], %s382
        %p384 = pneg %p62
        %p385 = pneg %p59
        %p386 = pneg %p83
        %p387 = pneg %p80
        %p388 = pneg %p104
        %p389 = pneg %p101
        %p390 = pneg %p125
        %p391 = pneg %p122
        %p392 = pneg %p146
        %p393 = pneg %p143
        %p394 = scmp.lt.s32.totalorder %s31, 1
        %s395 = scalar_select %p394, %s31, 1
        %s396 = smul.addr %s395, 4
        %s397 = smul.addr %s396, 8
        %s398 = scalar_lea.vmem %s5, %s397
        %p399 = pneg %p172
        %p400 = pneg %p169
        %p401 = pneg %p193
        %p402 = pneg %p190
        %p403 = pneg %p214
        %p404 = pneg %p211
        %p405 = pneg %p235
        %p406 = pneg %p232
        %p407 = pneg %p263
        %p408 = pneg %p260
        %s409 = sand.u32 %s250, 1
        %s410 = scalar_lea.sflag [#allocation6], %s409
        %s411 = sand.u32 %s250, 1
        %s412 = smul.addr %s411, 32
        %s413 = scalar_lea.vmem [#allocation5], %s412
        %p414 = scmp.lt.s32.totalorder %s31, 1
        %s415 = scalar_select %p414, %s31, 1
        %s416 = smul.addr %s415, 4
        %s417 = smul.addr %s416, 8
        %s418 = scalar_lea.vmem %s5, %s417
        %v419 = vld [vmem:[%s376] sm:$0xff]
        %v420 = vld [vmem:[%s376 + $0x8] sm:$0xff]
        %v421 = vld [vmem:[%s376 + $0x10] sm:$0xff]
        %v422 = vld [vmem:[%s376 + $0x18] sm:$0xff]
        %v423 = vld [vmem:[#allocation2] sm:$0x1]
        %s424 = vtos %v423
        %vm425 = vcmp.ge.f32.partialorder %v419, 0.0
        %vm426 = vcmp.ge.f32.partialorder %v420, 0.0
        %vm427 = vcmp.ge.f32.partialorder %v421, 0.0
        %vm428 = vcmp.ge.f32.partialorder %v422, 0.0
        %v429 = vstv %s424
        %v430 = vmul.f32 %v429, %v419
        %v431 = vmul.f32 %v429, %v420
        %v432 = vmul.f32 %v429, %v421
        %v433 = vmul.f32 %v429, %v422
        %v434 = vsel %vm425, %v419, %v430
        %v435 = vsel %vm426, %v420, %v431
        %v436 = vsel %vm427, %v421, %v432
        %v437 = vsel %vm428, %v422, %v433
        %v438 = vadd.f32 %v434, %v435
        %v439 = vadd.f32 %v438, %v436
        %v440 = vadd.f32 %v439, %v437
        %v441 = vrot.slane %v440, 4
        %v442 = vadd.f32 %v440, %v441
        %v443 = vrot.slane %v442, 2
        %v444 = vadd.f32 %v442, %v443
        %v445 = vrot.slane %v444, 1
        %v446 = vadd.f32 %v444, %v445
        %v447 = vrcp.pop 32.0
        %v448 = vmul.f32 %v446, %v447
        %v449 = vsub.f32 %v434, %v448
        %v450 = vsub.f32 %v435, %v448
        %v451 = vsub.f32 %v436, %v448
        %v452 = vsub.f32 %v437, %v448
        %v453 = vmul.f32 %v449, %v449
        %v454 = vmul.f32 %v450, %v450
        %v455 = vmul.f32 %v451, %v451
        %v456 = vmul.f32 %v452, %v452
        %v457 = vadd.f32 %v453, %v454
        %v458 = vadd.f32 %v457, %v455
        %v459 = vadd.f32 %v458, %v456
        %v460 = vrot.slane %v459, 4
        %v461 = vadd.f32 %v459, %v460
        %v462 = vrot.slane %v461, 2
        %v463 = vadd.f32 %v461, %v462
        %v464 = vrot.slane %v463, 1
        %v465 = vadd.f32 %v463, %v464
        %v466 = vmul.f32 %v465, %v447
        %v467 = vadd.f32 %v466, 1e-08
        %v468 = vrsqrt.pop %v467
        %v469 = vmul.f32 %v449, %v468
        %v470 = vmul.f32 %v450, %v468
        %v471 = vmul.f32 %v451, %v468
        %v472 = vmul.f32 %v452, %v468
        %v473 = vld [vmem:[%s2] sm:$0xff]
        %v474 = vld [vmem:[%s2 + $0x8] sm:$0xff]
        %v475 = vld [vmem:[%s2 + $0x10] sm:$0xff]
        %v476 = vld [vmem:[%s2 + $0x18] sm:$0xff]
        %478 = vset.pattern.permute.xlu0 0
        %479 = vperm.xlu0 %478, %v473
        %v480 = vpop.permute.xlu0 %479
        %483 = vset.pattern.permute.xlu0 0
        %484 = vperm.xlu0 %483, %v474
        %v485 = vpop.permute.xlu0 %484
        %488 = vset.pattern.permute.xlu0 0
        %489 = vperm.xlu0 %488, %v475
        %v490 = vpop.permute.xlu0 %489
        %493 = vset.pattern.permute.xlu0 0
        %494 = vperm.xlu0 %493, %v476
        %v495 = vpop.permute.xlu0 %494
        %v497 = vmul.f32 %v469, %v480
        %v498 = vmul.f32 %v470, %v485
        %v499 = vmul.f32 %v471, %v490
        %v500 = vmul.f32 %v472, %v495
        %v501 = vld [vmem:[%s3] sm:$0xff]
        %v502 = vld [vmem:[%s3 + $0x8] sm:$0xff]
        %v503 = vld [vmem:[%s3 + $0x10] sm:$0xff]
        %v504 = vld [vmem:[%s3 + $0x18] sm:$0xff]
        %506 = vset.pattern.permute.xlu0 0
        %507 = vperm.xlu0 %506, %v501
        %v508 = vpop.permute.xlu0 %507
        %511 = vset.pattern.permute.xlu0 0
        %512 = vperm.xlu0 %511, %v502
        %v513 = vpop.permute.xlu0 %512
        %516 = vset.pattern.permute.xlu0 0
        %517 = vperm.xlu0 %516, %v503
        %v518 = vpop.permute.xlu0 %517
        %521 = vset.pattern.permute.xlu0 0
        %522 = vperm.xlu0 %521, %v504
        %v523 = vpop.permute.xlu0 %522
        %v525 = vadd.f32 %v497, %v508
        %v526 = vadd.f32 %v498, %v513
        %v527 = vadd.f32 %v499, %v518
        %v528 = vadd.f32 %v500, %v523
        %v529 = vld [vmem:[%s4] sm:$0xff]
        %v530 = vld [vmem:[%s4 + $0x8] sm:$0xff]
        %v531 = vld [vmem:[%s4 + $0x10] sm:$0xff]
        %v532 = vld [vmem:[%s4 + $0x18] sm:$0xff]
        %v533 = vld [vmem:[%s418] sm:$0xff]
        %v534 = vld [vmem:[%s418 + $0x8] sm:$0xff]
        %v535 = vld [vmem:[%s418 + $0x10] sm:$0xff]
        %v536 = vld [vmem:[%s418 + $0x18] sm:$0xff]
        %538 = vset.pattern.permute.xlu0 0
        %539 = vperm.xlu0 %538, %v533
        %v540 = vpop.permute.xlu0 %539
        %543 = vset.pattern.permute.xlu0 0
        %544 = vperm.xlu0 %543, %v534
        %v545 = vpop.permute.xlu0 %544
        %548 = vset.pattern.permute.xlu0 0
        %549 = vperm.xlu0 %548, %v535
        %v550 = vpop.permute.xlu0 %549
        %553 = vset.pattern.permute.xlu0 0
        %554 = vperm.xlu0 %553, %v536
        %v555 = vpop.permute.xlu0 %554
        %vm557 = vcmask 261120
        %v559 = vsel %vm557, %v529, 0
        %v562 = vsel %vm557, %v530, 0
        %v565 = vsel %vm557, %v531, 0
        %v568 = vsel %vm557, %v532, 0
        %570 = vmatprep.subr.mxu0 0.0
        %571 = vmatpush1.msra.mxu0 %v525
        %572 = vmatprep.subr.mxu0 0.0
        %573 = vmatpush1.msra.mxu0 %v526
        %574 = vmatprep.subr.mxu0 0.0
        %575 = vmatpush1.msra.mxu0 %v527
        %576 = vmatprep.subr.mxu0 0.0
        %577 = vmatpush1.msra.mxu0 %v528
        %578 = vmatprep.subr.mxu0 0.0
        %579 = vmatpush1.msra.mxu0 0.0
        %580 = vmatprep.subr.mxu0 0.0
        %581 = vmatpush1.msra.mxu0 0.0
        %582 = vmatprep.subr.mxu0 0.0
        %583 = vmatpush1.msra.mxu0 0.0
        %584 = vmatprep.subr.mxu0 0.0
        %585 = vmatpush1.msra.mxu0 0.0
        %586 = vmatprep.subr.mxu0 0.0
        %587 = vmatpush1.msra.mxu0 0.0
        %588 = vmatprep.subr.mxu0 0.0
        %589 = vmatpush1.msra.mxu0 0.0
        %590 = vmatprep.subr.mxu0 0.0
        %591 = vmatpush1.msra.mxu0 0.0
        %592 = vmatprep.subr.mxu0 0.0
        %593 = vmatpush1.msra.mxu0 0.0
        %594 = vmatprep.subr.mxu0 0.0
        %595 = vmatpush1.msra.mxu0 0.0
        %596 = vmatprep.subr.mxu0 0.0
        %597 = vmatpush1.msra.mxu0 0.0
        %598 = vmatprep.subr.mxu0 0.0
        %599 = vmatpush1.msra.mxu0 0.0
        %600 = vmatprep.subr.mxu0 0.0
        %601 = vmatpush1.msra.mxu0 0.0
        %602 = vmatprep.subr.mxu0 0.0
        %603 = vmatpush1.msra.mxu0 0.0
        %604 = vmatprep.subr.mxu0 0.0
        %605 = vmatpush1.msra.mxu0 0.0
        %606 = vmatprep.subr.mxu0 0.0
        %607 = vmatpush1.msra.mxu0 0.0
        %608 = vmatprep.subr.mxu0 0.0
        %609 = vmatpush1.msra.mxu0 0.0
        %610 = vmatprep.subr.mxu0 0.0
        %611 = vmatpush1.msra.mxu0 0.0
        %612 = vmatprep.subr.mxu0 0.0
        %613 = vmatpush1.msra.mxu0 0.0
        %614 = vmatprep.subr.mxu0 0.0
        %615 = vmatpush1.msra.mxu0 0.0
        %616 = vmatprep.subr.mxu0 0.0
        %617 = vmatpush1.msra.mxu0 0.0
        %618 = vmatprep.subr.mxu0 0.0
        %619 = vmatpush1.msra.mxu0 0.0
        %620 = vmatprep.subr.mxu0 0.0
        %621 = vmatpush1.msra.mxu0 0.0
        %622 = vmatprep.subr.mxu0 0.0
        %623 = vmatpush1.msra.mxu0 0.0
        %624 = vmatprep.subr.mxu0 0.0
        %625 = vmatpush1.msra.mxu0 0.0
        %626 = vmatprep.subr.mxu0 0.0
        %627 = vmatpush1.msra.mxu0 0.0
        %628 = vmatprep.subr.mxu0 0.0
        %629 = vmatpush1.msra.mxu0 0.0
        %630 = vmatprep.subr.mxu0 0.0
        %631 = vmatpush1.msra.mxu0 0.0
        %632 = vmatprep.subr.mxu0 0.0
        %633 = vmatpush1.msra.mxu0 0.0
        %634 = vmatprep.mubr.f32.mxu0 0.0
        %635 = vmatmul.mubr.f32.gmra.mrb[0].mxu0 %v559
        %v636 = vpop.f32.mrb[0].mxu0
        %v637 = vadd.f32 %v540, %v636
        %v638 = vpop.f32.mrb[0].mxu0
        %639 = vmatprep.mubr.f32.mxu0 0.0
        %640 = vmatmul.mubr.f32.gmra.mrb[0].mxu0 %v562
        %v641 = vpop.f32.mrb[0].mxu0
        %v642 = vadd.f32 %v545, %v641
        %v643 = vpop.f32.mrb[0].mxu0
        %644 = vmatprep.mubr.f32.mxu0 0.0
        %645 = vmatmul.mubr.f32.gmra.mrb[0].mxu0 %v565
        %v646 = vpop.f32.mrb[0].mxu0
        %v647 = vadd.f32 %v550, %v646
        %v648 = vpop.f32.mrb[0].mxu0
        %649 = vmatprep.mubr.f32.mxu0 0.0
        %650 = vmatmul.mubr.f32.gmra.mrb[0].mxu0 %v568
        %v651 = vpop.f32.mrb[0].mxu0
        %v652 = vadd.f32 %v555, %v651
        %v653 = vpop.f32.mrb[0].mxu0
        %654 = vdwg.mxu0
        %v655 = vld [vmem:[#allocation3] sm:$0x1]
        %s656 = vtos %v655
        %vm657 = vcmp.ge.f32.partialorder %v637, 0.0
        %vm658 = vcmp.ge.f32.partialorder %v642, 0.0
        %vm659 = vcmp.ge.f32.partialorder %v647, 0.0
        %vm660 = vcmp.ge.f32.partialorder %v652, 0.0
        %v661 = vstv %s656
        %v662 = vmul.f32 %v661, %v637
        %v663 = vmul.f32 %v661, %v642
        %v664 = vmul.f32 %v661, %v647
        %v665 = vmul.f32 %v661, %v652
        %v666 = vsel %vm657, %v637, %v662
        %v667 = vsel %vm658, %v642, %v663
        %v668 = vsel %vm659, %v647, %v664
        %v669 = vsel %vm660, %v652, %v665
        %v670 = vadd.f32 %v666, %v667
        %v671 = vadd.f32 %v670, %v668
        %v672 = vadd.f32 %v671, %v669
        %v673 = vrot.slane %v672, 4
        %v674 = vadd.f32 %v672, %v673
        %v675 = vrot.slane %v674, 2
        %v676 = vadd.f32 %v674, %v675
        %v677 = vrot.slane %v676, 1
        %v678 = vadd.f32 %v676, %v677
        %v679 = vmul.f32 %v678, %v447
        %v680 = vsub.f32 %v666, %v679
        %v681 = vsub.f32 %v667, %v679
        %v682 = vsub.f32 %v668, %v679
        %v683 = vsub.f32 %v669, %v679
        %v684 = vmul.f32 %v680, %v680
        %v685 = vmul.f32 %v681, %v681
        %v686 = vmul.f32 %v682, %v682
        %v687 = vmul.f32 %v683, %v683
        %v688 = vadd.f32 %v684, %v685
        %v689 = vadd.f32 %v688, %v686
        %v690 = vadd.f32 %v689, %v687
        %v691 = vrot.slane %v690, 4
        %v692 = vadd.f32 %v690, %v691
        %v693 = vrot.slane %v692, 2
        %v694 = vadd.f32 %v692, %v693
        %v695 = vrot.slane %v694, 1
        %v696 = vadd.f32 %v694, %v695
        %v697 = vmul.f32 %v696, %v447
        %v698 = vadd.f32 %v697, 1e-08
        %v699 = vrsqrt.pop %v698
        %v700 = vmul.f32 %v680, %v699
        %v701 = vmul.f32 %v681, %v699
        %v702 = vmul.f32 %v682, %v699
        %v703 = vmul.f32 %v683, %v699
        %v704 = vld [vmem:[%s7] sm:$0xff]
        %v705 = vld [vmem:[%s7 + $0x8] sm:$0xff]
        %v706 = vld [vmem:[%s7 + $0x10] sm:$0xff]
        %v707 = vld [vmem:[%s7 + $0x18] sm:$0xff]
        %709 = vset.pattern.permute.xlu0 0
        %710 = vperm.xlu0 %709, %v704
        %v711 = vpop.permute.xlu0 %710
        %714 = vset.pattern.permute.xlu0 0
        %715 = vperm.xlu0 %714, %v705
        %v716 = vpop.permute.xlu0 %715
        %719 = vset.pattern.permute.xlu0 0
        %720 = vperm.xlu0 %719, %v706
        %v721 = vpop.permute.xlu0 %720
        %724 = vset.pattern.permute.xlu0 0
        %725 = vperm.xlu0 %724, %v707
        %v726 = vpop.permute.xlu0 %725
        %v728 = vmul.f32 %v700, %v711
        %v729 = vmul.f32 %v701, %v716
        %v730 = vmul.f32 %v702, %v721
        %v731 = vmul.f32 %v703, %v726
        %v732 = vld [vmem:[%s8] sm:$0xff]
        %v733 = vld [vmem:[%s8 + $0x8] sm:$0xff]
        %v734 = vld [vmem:[%s8 + $0x10] sm:$0xff]
        %v735 = vld [vmem:[%s8 + $0x18] sm:$0xff]
        %737 = vset.pattern.permute.xlu0 0
        %738 = vperm.xlu0 %737, %v732
        %v739 = vpop.permute.xlu0 %738
        %742 = vset.pattern.permute.xlu0 0
        %743 = vperm.xlu0 %742, %v733
        %v744 = vpop.permute.xlu0 %743
        %747 = vset.pattern.permute.xlu0 0
        %748 = vperm.xlu0 %747, %v734
        %v749 = vpop.permute.xlu0 %748
        %752 = vset.pattern.permute.xlu0 0
        %753 = vperm.xlu0 %752, %v735
        %v754 = vpop.permute.xlu0 %753
        %v756 = vadd.f32 %v728, %v739
        %v757 = vadd.f32 %v729, %v744
        %v758 = vadd.f32 %v730, %v749
        %v759 = vadd.f32 %v731, %v754
        %v760 = vadd.f32 %v419, %v756
        %v761 = vadd.f32 %v420, %v757
        %v762 = vadd.f32 %v421, %v758
        %v763 = vadd.f32 %v422, %v759
        %764 = vst [vmem:[%s413] sm:$0xff] %v760
        %765 = vst [vmem:[%s413 + $0x8] sm:$0xff] %v761
        %766 = vst [vmem:[%s413 + $0x10] sm:$0xff] %v762
        %767 = vst [vmem:[%s413 + $0x18] sm:$0xff] %v763
        %s768 = sand.u32 %s250, 1
        %s769 = scalar_lea.sflag [#allocation6], %s768
        %s770 = sand.u32 %s250, 1
        %s771 = smul.addr %s770, 32
        %s772 = scalar_lea.vmem [#allocation5], %s771
        // Predicated region
        $region95: #{tpu_custom_call.1} parent=89 // pred_check
          %p773 = pneg %p260
        $region96: #{tpu_custom_call.1} parent=89 // pred_check_branch
          %775 = sbr.rel (%p773) target = $region98
        $region97: #{tpu_custom_call.1} parent=89 // pred_region
          %s777 = ssub.s32 512, 512
          %778 = vsyncadd %s769, %s777
          %s779 = smul.addr %s31, 8
          %s780 = sadd.s32 %s32, %s779
          %s781 = smul.addr %s780, 128
          %s782 = scalar_lea.hbm %s9, %s781
          %s783 = sshll.u32 %s772, 4
          %s784 = int_to_ptr.vmem [resolvable:$true] %s783
          %789 = dma.vmem_to_hbm [thread:$0]  %s784, 512, %s782, %s769, 128, 256, 8
        $region98: #{tpu_custom_call.1} parent=89 // pred_fallthru
          _
      $region90: #{tpu_custom_call.1} parent=5 // pred_fallthru
        _
      %p790 = scmp.le.s32.totalorder 2, %s22
      // Predicated region
      $region99: #{tpu_custom_call.1} parent=5 // pred_check
        %p791 = pneg %p790
      $region100: #{tpu_custom_call.1} parent=5 // pred_check_branch
        %793 = sbr.rel (%p791) target = $region102
      $region101: #{tpu_custom_call.1} parent=5 // pred_region
        %s794 = ssub.s32 %s22, 2
        // Predicated region
        $region103: #{tpu_custom_call.1} parent=101 // pred_check
          %p795 = pneg %p266
        $region104: #{tpu_custom_call.1} parent=101 // pred_check_branch
          %797 = sbr.rel (%p795) target = $region106
        $region105: #{tpu_custom_call.1} parent=101 // pred_region
          %s798 = sand.u32 %s251, 1
          %s799 = scalar_lea.sflag [#allocation6], %s798
          %s800 = sand.u32 %s251, 1
          %s801 = smul.addr %s800, 32
          %s802 = scalar_lea.vmem [#allocation5], %s801
          %803 = dma.done %s799, 512
        $region106: #{tpu_custom_call.1} parent=101 // pred_fallthru
          _
      $region102: #{tpu_custom_call.1} parent=5 // pred_fallthru
        _
    $region6: #{tpu_custom_call.1} parent=1 // loop_footer
      %s26 = sadd.s32 1, %s22
    $region7: #{tpu_custom_call.1} parent=1 // loop_footer_branch
      %21 = sbr.rel target = $region3
    $region8: #{tpu_custom_call.1} parent=1 // loop_exit
      _
    %804 = vsyncpa [#allocation6], 1
    %s805 = scalar_lea.sflag [#allocation6], 1
    %806 = vsyncpa %s805, 1

</llo_original>
